<compile_context>
chip_gen: v5e
topology: v5e:2x2
jax: 0.10.0
libtpu: 0.0.40
codegen_flags: <defaults>
</compile_context>

<pallas_src>
import jax
import jax.numpy as jnp
from jax import lax
from jax.experimental import pallas as pl
from jax.experimental.pallas import tpu as pltpu


def _hardswish(v):
    # hardswish(v) = v * relu6(v + 3) / 6
    return v * jnp.clip(v + 3.0, 0.0, 6.0) * (1.0 / 6.0)


def _roll(x, shift, axis):
    """pltpu.roll with the shift normalized to [0, n); no-op for zero shift."""
    n = x.shape[axis]
    s = shift % n
    if s == 0:
        return x
    return pltpu.roll(x, shift=s, axis=axis)


def _make_resblock_kernel(C):
    def kernel(x_ref, w1_ref, b1_ref, w2c_ref, b2_ref, o_ref):
        # x_ref  : (1, H, W*C)   input block, fused (W, C) lane layout
        # w1_ref : (3, 3, W*C)   depthwise taps tiled across W, W-border zeros folded in
        # b1_ref : (1, W*C)      depthwise bias tiled across W
        # w2c_ref: (2C-1, W*C)   1x1-conv coefficients, one row per lane-shift d = co - ci
        # b2_ref : (1, W*C)      pointwise bias tiled across W
        # o_ref  : (1, H, W*C)
        H = x_ref.shape[1]
        WC = x_ref.shape[2]
        x = x_ref[0].astype(jnp.float32)                        # (H, WC)

        row = lax.broadcasted_iota(jnp.int32, (H, WC), 0)

        # ---- depthwise 3x3 conv: 9 VPU FMAs; shifts go to the XLU via roll ----
        acc = jnp.zeros((H, WC), jnp.float32)
        for kh in range(3):
            dh = kh - 1
            xh = _roll(x, -dh, 0)                               # xh[h] = x[h + dh]
            if dh < 0:                                          # top image border
                xh = jnp.where(row >= -dh, xh, 0.0)
            elif dh > 0:                                        # bottom image border
                xh = jnp.where(row < H - dh, xh, 0.0)
            for kw in range(3):
                dw = kw - 1
                xt = _roll(xh, -dw * C, 1)                      # xt[., w*C+c] = xh[., (w+dw)*C+c]
                # W-image-border zeros are already folded into w1_ref taps.
                acc = acc + xt * w1_ref[kh, kw, :]
        h1 = _hardswish(acc + b1_ref[0, :])

        # ---- 1x1 conv over channels, kept in the fused-lane layout ----
        # y[., w*C + co] = sum_ci h1[., w*C + ci] * w2[ci, co]
        # = sum over lane-shift d of roll(h1, d) * coef_d   (coef_d precomputed).
        y = jnp.zeros((H, WC), jnp.float32)
        for idx in range(2 * C - 1):
            d = idx - (C - 1)
            y = y + _roll(h1, d, 1) * w2c_ref[idx, :]
        y = _hardswish(y + b2_ref[0, :])

        # residual add straight from the (unsliced) input block
        o_ref[0] = (y + x).astype(o_ref.dtype)

    return kernel


def _pack_params(w1_hwc, b1, w2_io, b2, W):
    """Pre-tile weights/biases to the fused (W*C) lane layout (tiny, done once)."""
    C = w1_hwc.shape[-1]
    w_idx = jnp.arange(W)

    # Depthwise taps tiled across W, with the W-image-border zero padding folded in.
    taps = []
    for kh in range(3):
        kh_taps = []
        for kw in range(3):
            dw = kw - 1
            valid_w = ((w_idx + dw >= 0) & (w_idx + dw < W)).astype(w1_hwc.dtype)
            kh_taps.append(jnp.tile(w1_hwc[kh, kw], W) * jnp.repeat(valid_w, C))
        taps.append(jnp.stack(kh_taps))
    w1_taps = jnp.stack(taps)                                   # (3, 3, W*C)

    b1_t = jnp.tile(b1, W)[None, :]                             # (1, W*C)
    b2_t = jnp.tile(b2, W)[None, :]                             # (1, W*C)

    # 1x1-conv coefficients per lane shift d = co - ci in [-(C-1), C-1].
    co = jnp.arange(C)
    coefs = []
    for idx in range(2 * C - 1):
        d = idx - (C - 1)
        ci = co - d
        valid = (ci >= 0) & (ci < C)
        coef_c = jnp.where(valid, w2_io[jnp.clip(ci, 0, C - 1), co], 0.0)
        coefs.append(jnp.tile(coef_c, W))
    w2_coefs = jnp.stack(coefs).astype(w2_io.dtype)             # (2C-1, W*C)

    return w1_taps, b1_t, w2_coefs, b2_t


def resblock_forward(x_nhwc, w1_hwc, b1, w2_io, b2):
    """x_nhwc: (B, H, W, C). Returns (B, H, W, C).

    A PyTorch-style NCHW caller should transpose to NHWC once, outside the hot
    path; everything here stays in the channels-last fused-lane layout, and the
    (B,H,W,C)<->(B,H,W*C) reshapes below are free (contiguous minor-dim collapse).
    """
    B, H, W, C = x_nhwc.shape
    WC = W * C
    x_f = x_nhwc.reshape(B, H, WC)
    w1_taps, b1_t, w2_coefs, b2_t = _pack_params(w1_hwc, b1, w2_io, b2, W)

    out = pl.pallas_call(
        _make_resblock_kernel(C),
        out_shape=jax.ShapeDtypeStruct((B, H, WC), x_nhwc.dtype),
        grid_spec=pltpu.PrefetchScalarGridSpec(
            num_scalar_prefetch=0,
            grid=(B,),
            in_specs=[
                pl.BlockSpec((1, H, WC), lambda b: (b, 0, 0)),
                pl.BlockSpec((3, 3, WC), lambda b: (0, 0, 0)),
                pl.BlockSpec((1, WC), lambda b: (0, 0)),
                pl.BlockSpec((2 * C - 1, WC), lambda b: (0, 0)),
                pl.BlockSpec((1, WC), lambda b: (0, 0)),
            ],
            out_specs=pl.BlockSpec((1, H, WC), lambda b: (b, 0, 0)),
        ),
        compiler_params=pltpu.CompilerParams(
            dimension_semantics=("parallel",)),
    )(x_f, w1_taps, b1_t, w2_coefs, b2_t)

    return out.reshape(B, H, W, C)


def resblock_reference(x_nhwc, w1_hwc, b1, w2_io, b2):
    """Pure-JAX reference (independent of the kernel's fused-lane tricks)."""
    B, H, W, C = x_nhwc.shape
    w1_hwio = w1_hwc.reshape(3, 3, 1, C)
    d = lax.conv_general_dilated(
        x_nhwc, w1_hwio, window_strides=(1, 1), padding="SAME",
        dimension_numbers=("NHWC", "HWIO", "NHWC"),
        feature_group_count=C)
    d = _hardswish(d + b1)
    p = _hardswish(jnp.einsum("bhwc,cd->bhwd", d, w2_io) + b2)
    return p + x_nhwc


if __name__ == "__main__":
    # W*C = 16*8 = 128 -> fully lane-dense vregs; B=8 -> 8 pipeline steps.
    B, H, W, C = 8, 16, 16, 8

    key = jax.random.PRNGKey(0)
    kx, k1, k2, k3, k4 = jax.random.split(key, 5)

    # PyTorch parameter mapping:
    #   conv1.weight (C,1,3,3) -> (3,3,C) ; conv2.weight (C,C,1,1) -> (C_in, C_out)
    x = jax.random.normal(kx, (B, H, W, C), dtype=jnp.float32)
    w1 = jax.random.normal(k1, (3, 3, C), dtype=jnp.float32) * 0.2
    b1 = jax.random.normal(k2, (C,), dtype=jnp.float32) * 0.1
    w2 = jax.random.normal(k3, (C, C), dtype=jnp.float32) * 0.2
    b2 = jax.random.normal(k4, (C,), dtype=jnp.float32) * 0.1

    out = resblock_forward(x, w1, b1, w2, b2)
    out = jax.block_until_ready(out)

    ref = resblock_reference(x, w1, b1, w2, b2)
    assert out.shape == (B, H, W, C)
    assert jnp.allclose(out, ref, atol=1e-4, rtol=1e-4), "mismatch vs reference"

    print("KERNEL_OK")
</pallas_src>

<mosaic_0001>
module attributes {stable_mosaic.version = 11 : i64} {
  func.func @kernel(%arg0: i32, %arg1: memref<1x16x128xf32, #tpu.memory_space<vmem>>, %arg2: memref<3x3x128xf32, #tpu.memory_space<vmem>>, %arg3: memref<1x128xf32, #tpu.memory_space<vmem>>, %arg4: memref<15x128xf32, #tpu.memory_space<vmem>>, %arg5: memref<1x128xf32, #tpu.memory_space<vmem>>, %arg6: memref<1x16x128xf32, #tpu.memory_space<vmem>>) attributes {dimension_semantics = [#tpu.dimension_semantics<parallel>], iteration_bounds = array<i64: 8>, scalar_prefetch = 0 : i64, scratch_operands = 0 : i64, tpu.core_type = #tpu.core_type<tc>, window_params = [{transform_indices = @transform_0, window_bounds = array<i64: 1, 16, 128>}, {pipeline_mode = #tpu.pipeline_mode<synchronous>, transform_indices = @transform_1, window_bounds = array<i64: 3, 3, 128>}, {pipeline_mode = #tpu.pipeline_mode<synchronous>, transform_indices = @transform_2, window_bounds = array<i64: 1, 128>}, {pipeline_mode = #tpu.pipeline_mode<synchronous>, transform_indices = @transform_3, window_bounds = array<i64: 15, 128>}, {pipeline_mode = #tpu.pipeline_mode<synchronous>, transform_indices = @transform_4, window_bounds = array<i64: 1, 128>}, {transform_indices = @transform_5, window_bounds = array<i64: 1, 16, 128>}]} {
    %c0 = arith.constant 0 : index
    %c0_0 = arith.constant 0 : index
    %c0_1 = arith.constant 0 : index
    %0 = vector.load %arg1[%c0, %c0_0, %c0_1] : memref<1x16x128xf32, #tpu.memory_space<vmem>>, vector<1x16x128xf32>
    %1 = vector.shape_cast %0 : vector<1x16x128xf32> to vector<16x128xf32>
    %2 = tpu.iota {dimensions = array<i32: 0>} : vector<16x128xi32>
    %cst = arith.constant 0.000000e+00 : f32
    %3 = vector.broadcast %cst : f32 to vector<16x128xf32>
    %c1_i32 = arith.constant 1 : i32
    %4 = tpu.dynamic_rotate %1 by %c1_i32 dim 0 : vector<16x128xf32>, i32 -> vector<16x128xf32>
    %c1_i32_2 = arith.constant 1 : i32
    %5 = vector.broadcast %c1_i32_2 : i32 to vector<16x128xi32>
    %6 = arith.cmpi sge, %2, %5 : vector<16x128xi32>
    %cst_3 = arith.constant 0.000000e+00 : f32
    %7 = vector.broadcast %cst_3 : f32 to vector<16x128xf32>
    %8 = arith.select %6, %4, %7 : vector<16x128xi1>, vector<16x128xf32>
    %c8_i32 = arith.constant 8 : i32
    %9 = tpu.dynamic_rotate %8 by %c8_i32 dim 1 : vector<16x128xf32>, i32 -> vector<16x128xf32>
    %c0_4 = arith.constant 0 : index
    %c0_5 = arith.constant 0 : index
    %c0_6 = arith.constant 0 : index
    %10 = vector.load %arg2[%c0_4, %c0_5, %c0_6] : memref<3x3x128xf32, #tpu.memory_space<vmem>>, vector<1x1x128xf32>
    %11 = vector.shape_cast %10 : vector<1x1x128xf32> to vector<128xf32>
    %12 = vector.shape_cast %11 : vector<128xf32> to vector<1x128xf32>
    %13 = vector.broadcast %12 : vector<1x128xf32> to vector<16x128xf32>
    %14 = arith.mulf %9, %13 : vector<16x128xf32>
    %15 = arith.addf %3, %14 : vector<16x128xf32>
    %c0_7 = arith.constant 0 : index
    %c1 = arith.constant 1 : index
    %c0_8 = arith.constant 0 : index
    %16 = vector.load %arg2[%c0_7, %c1, %c0_8] : memref<3x3x128xf32, #tpu.memory_space<vmem>>, vector<1x1x128xf32>
    %17 = vector.shape_cast %16 : vector<1x1x128xf32> to vector<128xf32>
    %18 = vector.shape_cast %17 : vector<128xf32> to vector<1x128xf32>
    %19 = vector.broadcast %18 : vector<1x128xf32> to vector<16x128xf32>
    %20 = arith.mulf %8, %19 : vector<16x128xf32>
    %21 = arith.addf %15, %20 : vector<16x128xf32>
    %c120_i32 = arith.constant 120 : i32
    %22 = tpu.dynamic_rotate %8 by %c120_i32 dim 1 : vector<16x128xf32>, i32 -> vector<16x128xf32>
    %c0_9 = arith.constant 0 : index
    %c2 = arith.constant 2 : index
    %c0_10 = arith.constant 0 : index
    %23 = vector.load %arg2[%c0_9, %c2, %c0_10] : memref<3x3x128xf32, #tpu.memory_space<vmem>>, vector<1x1x128xf32>
    %24 = vector.shape_cast %23 : vector<1x1x128xf32> to vector<128xf32>
    %25 = vector.shape_cast %24 : vector<128xf32> to vector<1x128xf32>
    %26 = vector.broadcast %25 : vector<1x128xf32> to vector<16x128xf32>
    %27 = arith.mulf %22, %26 : vector<16x128xf32>
    %28 = arith.addf %21, %27 : vector<16x128xf32>
    %c8_i32_11 = arith.constant 8 : i32
    %29 = tpu.dynamic_rotate %1 by %c8_i32_11 dim 1 : vector<16x128xf32>, i32 -> vector<16x128xf32>
    %c1_12 = arith.constant 1 : index
    %c0_13 = arith.constant 0 : index
    %c0_14 = arith.constant 0 : index
    %30 = vector.load %arg2[%c1_12, %c0_13, %c0_14] : memref<3x3x128xf32, #tpu.memory_space<vmem>>, vector<1x1x128xf32>
    %31 = vector.shape_cast %30 : vector<1x1x128xf32> to vector<128xf32>
    %32 = vector.shape_cast %31 : vector<128xf32> to vector<1x128xf32>
    %33 = vector.broadcast %32 : vector<1x128xf32> to vector<16x128xf32>
    %34 = arith.mulf %29, %33 : vector<16x128xf32>
    %35 = arith.addf %28, %34 : vector<16x128xf32>
    %c1_15 = arith.constant 1 : index
    %c1_16 = arith.constant 1 : index
    %c0_17 = arith.constant 0 : index
    %36 = vector.load %arg2[%c1_15, %c1_16, %c0_17] : memref<3x3x128xf32, #tpu.memory_space<vmem>>, vector<1x1x128xf32>
    %37 = vector.shape_cast %36 : vector<1x1x128xf32> to vector<128xf32>
    %38 = vector.shape_cast %37 : vector<128xf32> to vector<1x128xf32>
    %39 = vector.broadcast %38 : vector<1x128xf32> to vector<16x128xf32>
    %40 = arith.mulf %1, %39 : vector<16x128xf32>
    %41 = arith.addf %35, %40 : vector<16x128xf32>
    %c120_i32_18 = arith.constant 120 : i32
    %42 = tpu.dynamic_rotate %1 by %c120_i32_18 dim 1 : vector<16x128xf32>, i32 -> vector<16x128xf32>
    %c1_19 = arith.constant 1 : index
    %c2_20 = arith.constant 2 : index
    %c0_21 = arith.constant 0 : index
    %43 = vector.load %arg2[%c1_19, %c2_20, %c0_21] : memref<3x3x128xf32, #tpu.memory_space<vmem>>, vector<1x1x128xf32>
    %44 = vector.shape_cast %43 : vector<1x1x128xf32> to vector<128xf32>
    %45 = vector.shape_cast %44 : vector<128xf32> to vector<1x128xf32>
    %46 = vector.broadcast %45 : vector<1x128xf32> to vector<16x128xf32>
    %47 = arith.mulf %42, %46 : vector<16x128xf32>
    %48 = arith.addf %41, %47 : vector<16x128xf32>
    %c15_i32 = arith.constant 15 : i32
    %49 = tpu.dynamic_rotate %1 by %c15_i32 dim 0 : vector<16x128xf32>, i32 -> vector<16x128xf32>
    %c15_i32_22 = arith.constant 15 : i32
    %50 = vector.broadcast %c15_i32_22 : i32 to vector<16x128xi32>
    %51 = arith.cmpi slt, %2, %50 : vector<16x128xi32>
    %cst_23 = arith.constant 0.000000e+00 : f32
    %52 = vector.broadcast %cst_23 : f32 to vector<16x128xf32>
    %53 = arith.select %51, %49, %52 : vector<16x128xi1>, vector<16x128xf32>
    %c8_i32_24 = arith.constant 8 : i32
    %54 = tpu.dynamic_rotate %53 by %c8_i32_24 dim 1 : vector<16x128xf32>, i32 -> vector<16x128xf32>
    %c2_25 = arith.constant 2 : index
    %c0_26 = arith.constant 0 : index
    %c0_27 = arith.constant 0 : index
    %55 = vector.load %arg2[%c2_25, %c0_26, %c0_27] : memref<3x3x128xf32, #tpu.memory_space<vmem>>, vector<1x1x128xf32>
    %56 = vector.shape_cast %55 : vector<1x1x128xf32> to vector<128xf32>
    %57 = vector.shape_cast %56 : vector<128xf32> to vector<1x128xf32>
    %58 = vector.broadcast %57 : vector<1x128xf32> to vector<16x128xf32>
    %59 = arith.mulf %54, %58 : vector<16x128xf32>
    %60 = arith.addf %48, %59 : vector<16x128xf32>
    %c2_28 = arith.constant 2 : index
    %c1_29 = arith.constant 1 : index
    %c0_30 = arith.constant 0 : index
    %61 = vector.load %arg2[%c2_28, %c1_29, %c0_30] : memref<3x3x128xf32, #tpu.memory_space<vmem>>, vector<1x1x128xf32>
    %62 = vector.shape_cast %61 : vector<1x1x128xf32> to vector<128xf32>
    %63 = vector.shape_cast %62 : vector<128xf32> to vector<1x128xf32>
    %64 = vector.broadcast %63 : vector<1x128xf32> to vector<16x128xf32>
    %65 = arith.mulf %53, %64 : vector<16x128xf32>
    %66 = arith.addf %60, %65 : vector<16x128xf32>
    %c120_i32_31 = arith.constant 120 : i32
    %67 = tpu.dynamic_rotate %53 by %c120_i32_31 dim 1 : vector<16x128xf32>, i32 -> vector<16x128xf32>
    %c2_32 = arith.constant 2 : index
    %c2_33 = arith.constant 2 : index
    %c0_34 = arith.constant 0 : index
    %68 = vector.load %arg2[%c2_32, %c2_33, %c0_34] : memref<3x3x128xf32, #tpu.memory_space<vmem>>, vector<1x1x128xf32>
    %69 = vector.shape_cast %68 : vector<1x1x128xf32> to vector<128xf32>
    %70 = vector.shape_cast %69 : vector<128xf32> to vector<1x128xf32>
    %71 = vector.broadcast %70 : vector<1x128xf32> to vector<16x128xf32>
    %72 = arith.mulf %67, %71 : vector<16x128xf32>
    %73 = arith.addf %66, %72 : vector<16x128xf32>
    %c0_35 = arith.constant 0 : index
    %c0_36 = arith.constant 0 : index
    %74 = vector.load %arg3[%c0_35, %c0_36] : memref<1x128xf32, #tpu.memory_space<vmem>>, vector<1x128xf32>
    %75 = vector.shape_cast %74 : vector<1x128xf32> to vector<128xf32>
    %76 = vector.shape_cast %75 : vector<128xf32> to vector<1x128xf32>
    %77 = vector.broadcast %76 : vector<1x128xf32> to vector<16x128xf32>
    %78 = arith.addf %73, %77 : vector<16x128xf32>
    %cst_37 = arith.constant 3.000000e+00 : f32
    %79 = vector.broadcast %cst_37 : f32 to vector<16x128xf32>
    %80 = arith.addf %78, %79 : vector<16x128xf32>
    %cst_38 = arith.constant 0.000000e+00 : f32
    %cst_39 = arith.constant 6.000000e+00 : f32
    %81 = vector.broadcast %cst_38 : f32 to vector<16x128xf32>
    %82 = arith.maximumf %81, %80 : vector<16x128xf32>
    %83 = vector.broadcast %cst_39 : f32 to vector<16x128xf32>
    %84 = arith.minimumf %83, %82 : vector<16x128xf32>
    %85 = arith.mulf %78, %84 : vector<16x128xf32>
    %cst_40 = arith.constant 0.166666672 : f32
    %86 = vector.broadcast %cst_40 : f32 to vector<16x128xf32>
    %87 = arith.mulf %85, %86 : vector<16x128xf32>
    %cst_41 = arith.constant 0.000000e+00 : f32
    %88 = vector.broadcast %cst_41 : f32 to vector<16x128xf32>
    %c121_i32 = arith.constant 121 : i32
    %89 = tpu.dynamic_rotate %87 by %c121_i32 dim 1 : vector<16x128xf32>, i32 -> vector<16x128xf32>
    %c0_42 = arith.constant 0 : index
    %c0_43 = arith.constant 0 : index
    %90 = vector.load %arg4[%c0_42, %c0_43] : memref<15x128xf32, #tpu.memory_space<vmem>>, vector<1x128xf32>
    %91 = vector.shape_cast %90 : vector<1x128xf32> to vector<128xf32>
    %92 = vector.shape_cast %91 : vector<128xf32> to vector<1x128xf32>
    %93 = vector.broadcast %92 : vector<1x128xf32> to vector<16x128xf32>
    %94 = arith.mulf %89, %93 : vector<16x128xf32>
    %95 = arith.addf %88, %94 : vector<16x128xf32>
    %c122_i32 = arith.constant 122 : i32
    %96 = tpu.dynamic_rotate %87 by %c122_i32 dim 1 : vector<16x128xf32>, i32 -> vector<16x128xf32>
    %c1_44 = arith.constant 1 : index
    %c0_45 = arith.constant 0 : index
    %97 = vector.load %arg4[%c1_44, %c0_45] : memref<15x128xf32, #tpu.memory_space<vmem>>, vector<1x128xf32>
    %98 = vector.shape_cast %97 : vector<1x128xf32> to vector<128xf32>
    %99 = vector.shape_cast %98 : vector<128xf32> to vector<1x128xf32>
    %100 = vector.broadcast %99 : vector<1x128xf32> to vector<16x128xf32>
    %101 = arith.mulf %96, %100 : vector<16x128xf32>
    %102 = arith.addf %95, %101 : vector<16x128xf32>
    %c123_i32 = arith.constant 123 : i32
    %103 = tpu.dynamic_rotate %87 by %c123_i32 dim 1 : vector<16x128xf32>, i32 -> vector<16x128xf32>
    %c2_46 = arith.constant 2 : index
    %c0_47 = arith.constant 0 : index
    %104 = vector.load %arg4[%c2_46, %c0_47] : memref<15x128xf32, #tpu.memory_space<vmem>>, vector<1x128xf32>
    %105 = vector.shape_cast %104 : vector<1x128xf32> to vector<128xf32>
    %106 = vector.shape_cast %105 : vector<128xf32> to vector<1x128xf32>
    %107 = vector.broadcast %106 : vector<1x128xf32> to vector<16x128xf32>
    %108 = arith.mulf %103, %107 : vector<16x128xf32>
    %109 = arith.addf %102, %108 : vector<16x128xf32>
    %c124_i32 = arith.constant 124 : i32
    %110 = tpu.dynamic_rotate %87 by %c124_i32 dim 1 : vector<16x128xf32>, i32 -> vector<16x128xf32>
    %c3 = arith.constant 3 : index
    %c0_48 = arith.constant 0 : index
    %111 = vector.load %arg4[%c3, %c0_48] : memref<15x128xf32, #tpu.memory_space<vmem>>, vector<1x128xf32>
    %112 = vector.shape_cast %111 : vector<1x128xf32> to vector<128xf32>
    %113 = vector.shape_cast %112 : vector<128xf32> to vector<1x128xf32>
    %114 = vector.broadcast %113 : vector<1x128xf32> to vector<16x128xf32>
    %115 = arith.mulf %110, %114 : vector<16x128xf32>
    %116 = arith.addf %109, %115 : vector<16x128xf32>
    %c125_i32 = arith.constant 125 : i32
    %117 = tpu.dynamic_rotate %87 by %c125_i32 dim 1 : vector<16x128xf32>, i32 -> vector<16x128xf32>
    %c4 = arith.constant 4 : index
    %c0_49 = arith.constant 0 : index
    %118 = vector.load %arg4[%c4, %c0_49] : memref<15x128xf32, #tpu.memory_space<vmem>>, vector<1x128xf32>
    %119 = vector.shape_cast %118 : vector<1x128xf32> to vector<128xf32>
    %120 = vector.shape_cast %119 : vector<128xf32> to vector<1x128xf32>
    %121 = vector.broadcast %120 : vector<1x128xf32> to vector<16x128xf32>
    %122 = arith.mulf %117, %121 : vector<16x128xf32>
    %123 = arith.addf %116, %122 : vector<16x128xf32>
    %c126_i32 = arith.constant 126 : i32
    %124 = tpu.dynamic_rotate %87 by %c126_i32 dim 1 : vector<16x128xf32>, i32 -> vector<16x128xf32>
    %c5 = arith.constant 5 : index
    %c0_50 = arith.constant 0 : index
    %125 = vector.load %arg4[%c5, %c0_50] : memref<15x128xf32, #tpu.memory_space<vmem>>, vector<1x128xf32>
    %126 = vector.shape_cast %125 : vector<1x128xf32> to vector<128xf32>
    %127 = vector.shape_cast %126 : vector<128xf32> to vector<1x128xf32>
    %128 = vector.broadcast %127 : vector<1x128xf32> to vector<16x128xf32>
    %129 = arith.mulf %124, %128 : vector<16x128xf32>
    %130 = arith.addf %123, %129 : vector<16x128xf32>
    %c127_i32 = arith.constant 127 : i32
    %131 = tpu.dynamic_rotate %87 by %c127_i32 dim 1 : vector<16x128xf32>, i32 -> vector<16x128xf32>
    %c6 = arith.constant 6 : index
    %c0_51 = arith.constant 0 : index
    %132 = vector.load %arg4[%c6, %c0_51] : memref<15x128xf32, #tpu.memory_space<vmem>>, vector<1x128xf32>
    %133 = vector.shape_cast %132 : vector<1x128xf32> to vector<128xf32>
    %134 = vector.shape_cast %133 : vector<128xf32> to vector<1x128xf32>
    %135 = vector.broadcast %134 : vector<1x128xf32> to vector<16x128xf32>
    %136 = arith.mulf %131, %135 : vector<16x128xf32>
    %137 = arith.addf %130, %136 : vector<16x128xf32>
    %c7 = arith.constant 7 : index
    %c0_52 = arith.constant 0 : index
    %138 = vector.load %arg4[%c7, %c0_52] : memref<15x128xf32, #tpu.memory_space<vmem>>, vector<1x128xf32>
    %139 = vector.shape_cast %138 : vector<1x128xf32> to vector<128xf32>
    %140 = vector.shape_cast %139 : vector<128xf32> to vector<1x128xf32>
    %141 = vector.broadcast %140 : vector<1x128xf32> to vector<16x128xf32>
    %142 = arith.mulf %87, %141 : vector<16x128xf32>
    %143 = arith.addf %137, %142 : vector<16x128xf32>
    %c1_i32_53 = arith.constant 1 : i32
    %144 = tpu.dynamic_rotate %87 by %c1_i32_53 dim 1 : vector<16x128xf32>, i32 -> vector<16x128xf32>
    %c8 = arith.constant 8 : index
    %c0_54 = arith.constant 0 : index
    %145 = vector.load %arg4[%c8, %c0_54] : memref<15x128xf32, #tpu.memory_space<vmem>>, vector<1x128xf32>
    %146 = vector.shape_cast %145 : vector<1x128xf32> to vector<128xf32>
    %147 = vector.shape_cast %146 : vector<128xf32> to vector<1x128xf32>
    %148 = vector.broadcast %147 : vector<1x128xf32> to vector<16x128xf32>
    %149 = arith.mulf %144, %148 : vector<16x128xf32>
    %150 = arith.addf %143, %149 : vector<16x128xf32>
    %c2_i32 = arith.constant 2 : i32
    %151 = tpu.dynamic_rotate %87 by %c2_i32 dim 1 : vector<16x128xf32>, i32 -> vector<16x128xf32>
    %c9 = arith.constant 9 : index
    %c0_55 = arith.constant 0 : index
    %152 = vector.load %arg4[%c9, %c0_55] : memref<15x128xf32, #tpu.memory_space<vmem>>, vector<1x128xf32>
    %153 = vector.shape_cast %152 : vector<1x128xf32> to vector<128xf32>
    %154 = vector.shape_cast %153 : vector<128xf32> to vector<1x128xf32>
    %155 = vector.broadcast %154 : vector<1x128xf32> to vector<16x128xf32>
    %156 = arith.mulf %151, %155 : vector<16x128xf32>
    %157 = arith.addf %150, %156 : vector<16x128xf32>
    %c3_i32 = arith.constant 3 : i32
    %158 = tpu.dynamic_rotate %87 by %c3_i32 dim 1 : vector<16x128xf32>, i32 -> vector<16x128xf32>
    %c10 = arith.constant 10 : index
    %c0_56 = arith.constant 0 : index
    %159 = vector.load %arg4[%c10, %c0_56] : memref<15x128xf32, #tpu.memory_space<vmem>>, vector<1x128xf32>
    %160 = vector.shape_cast %159 : vector<1x128xf32> to vector<128xf32>
    %161 = vector.shape_cast %160 : vector<128xf32> to vector<1x128xf32>
    %162 = vector.broadcast %161 : vector<1x128xf32> to vector<16x128xf32>
    %163 = arith.mulf %158, %162 : vector<16x128xf32>
    %164 = arith.addf %157, %163 : vector<16x128xf32>
    %c4_i32 = arith.constant 4 : i32
    %165 = tpu.dynamic_rotate %87 by %c4_i32 dim 1 : vector<16x128xf32>, i32 -> vector<16x128xf32>
    %c11 = arith.constant 11 : index
    %c0_57 = arith.constant 0 : index
    %166 = vector.load %arg4[%c11, %c0_57] : memref<15x128xf32, #tpu.memory_space<vmem>>, vector<1x128xf32>
    %167 = vector.shape_cast %166 : vector<1x128xf32> to vector<128xf32>
    %168 = vector.shape_cast %167 : vector<128xf32> to vector<1x128xf32>
    %169 = vector.broadcast %168 : vector<1x128xf32> to vector<16x128xf32>
    %170 = arith.mulf %165, %169 : vector<16x128xf32>
    %171 = arith.addf %164, %170 : vector<16x128xf32>
    %c5_i32 = arith.constant 5 : i32
    %172 = tpu.dynamic_rotate %87 by %c5_i32 dim 1 : vector<16x128xf32>, i32 -> vector<16x128xf32>
    %c12 = arith.constant 12 : index
    %c0_58 = arith.constant 0 : index
    %173 = vector.load %arg4[%c12, %c0_58] : memref<15x128xf32, #tpu.memory_space<vmem>>, vector<1x128xf32>
    %174 = vector.shape_cast %173 : vector<1x128xf32> to vector<128xf32>
    %175 = vector.shape_cast %174 : vector<128xf32> to vector<1x128xf32>
    %176 = vector.broadcast %175 : vector<1x128xf32> to vector<16x128xf32>
    %177 = arith.mulf %172, %176 : vector<16x128xf32>
    %178 = arith.addf %171, %177 : vector<16x128xf32>
    %c6_i32 = arith.constant 6 : i32
    %179 = tpu.dynamic_rotate %87 by %c6_i32 dim 1 : vector<16x128xf32>, i32 -> vector<16x128xf32>
    %c13 = arith.constant 13 : index
    %c0_59 = arith.constant 0 : index
    %180 = vector.load %arg4[%c13, %c0_59] : memref<15x128xf32, #tpu.memory_space<vmem>>, vector<1x128xf32>
    %181 = vector.shape_cast %180 : vector<1x128xf32> to vector<128xf32>
    %182 = vector.shape_cast %181 : vector<128xf32> to vector<1x128xf32>
    %183 = vector.broadcast %182 : vector<1x128xf32> to vector<16x128xf32>
    %184 = arith.mulf %179, %183 : vector<16x128xf32>
    %185 = arith.addf %178, %184 : vector<16x128xf32>
    %c7_i32 = arith.constant 7 : i32
    %186 = tpu.dynamic_rotate %87 by %c7_i32 dim 1 : vector<16x128xf32>, i32 -> vector<16x128xf32>
    %c14 = arith.constant 14 : index
    %c0_60 = arith.constant 0 : index
    %187 = vector.load %arg4[%c14, %c0_60] : memref<15x128xf32, #tpu.memory_space<vmem>>, vector<1x128xf32>
    %188 = vector.shape_cast %187 : vector<1x128xf32> to vector<128xf32>
    %189 = vector.shape_cast %188 : vector<128xf32> to vector<1x128xf32>
    %190 = vector.broadcast %189 : vector<1x128xf32> to vector<16x128xf32>
    %191 = arith.mulf %186, %190 : vector<16x128xf32>
    %192 = arith.addf %185, %191 : vector<16x128xf32>
    %c0_61 = arith.constant 0 : index
    %c0_62 = arith.constant 0 : index
    %193 = vector.load %arg5[%c0_61, %c0_62] : memref<1x128xf32, #tpu.memory_space<vmem>>, vector<1x128xf32>
    %194 = vector.shape_cast %193 : vector<1x128xf32> to vector<128xf32>
    %195 = vector.shape_cast %194 : vector<128xf32> to vector<1x128xf32>
    %196 = vector.broadcast %195 : vector<1x128xf32> to vector<16x128xf32>
    %197 = arith.addf %192, %196 : vector<16x128xf32>
    %cst_63 = arith.constant 3.000000e+00 : f32
    %198 = vector.broadcast %cst_63 : f32 to vector<16x128xf32>
    %199 = arith.addf %197, %198 : vector<16x128xf32>
    %cst_64 = arith.constant 0.000000e+00 : f32
    %cst_65 = arith.constant 6.000000e+00 : f32
    %200 = vector.broadcast %cst_64 : f32 to vector<16x128xf32>
    %201 = arith.maximumf %200, %199 : vector<16x128xf32>
    %202 = vector.broadcast %cst_65 : f32 to vector<16x128xf32>
    %203 = arith.minimumf %202, %201 : vector<16x128xf32>
    %204 = arith.mulf %197, %203 : vector<16x128xf32>
    %cst_66 = arith.constant 0.166666672 : f32
    %205 = vector.broadcast %cst_66 : f32 to vector<16x128xf32>
    %206 = arith.mulf %204, %205 : vector<16x128xf32>
    %207 = arith.addf %206, %1 : vector<16x128xf32>
    %c0_67 = arith.constant 0 : index
    %c0_68 = arith.constant 0 : index
    %c0_69 = arith.constant 0 : index
    %208 = vector.load %arg6[%c0_67, %c0_68, %c0_69] : memref<1x16x128xf32, #tpu.memory_space<vmem>>, vector<1x16x128xf32>
    %209 = vector.shape_cast %208 : vector<1x16x128xf32> to vector<16x128xf32>
    %210 = vector.shape_cast %207 : vector<16x128xf32> to vector<1x16x128xf32>
    tpu.vector_store %arg6[%c0_67, %c0_68, %c0_69], %210 {strides = array<i32>} : memref<1x16x128xf32, #tpu.memory_space<vmem>>, vector<1x16x128xf32>,
    return
  }
  func.func @transform_0(%arg0: i32) -> (i32, i32, i32) {
    %c0_i32 = arith.constant 0 : i32
    %c0_i32_0 = arith.constant 0 : i32
    %c0_i32_1 = arith.constant 0 : i32
    return %arg0, %c0_i32, %c0_i32_0 : i32, i32, i32
  }
  func.func @transform_1(%arg0: i32) -> (i32, i32, i32) {
    %c0_i32 = arith.constant 0 : i32
    %c0_i32_0 = arith.constant 0 : i32
    %c0_i32_1 = arith.constant 0 : i32
    %c0_i32_2 = arith.constant 0 : i32
    return %c0_i32, %c0_i32_0, %c0_i32_1 : i32, i32, i32
  }
  func.func @transform_2(%arg0: i32) -> (i32, i32) {
    %c0_i32 = arith.constant 0 : i32
    %c0_i32_0 = arith.constant 0 : i32
    %c0_i32_1 = arith.constant 0 : i32
    return %c0_i32, %c0_i32_0 : i32, i32
  }
  func.func @transform_3(%arg0: i32) -> (i32, i32) {
    %c0_i32 = arith.constant 0 : i32
    %c0_i32_0 = arith.constant 0 : i32
    %c0_i32_1 = arith.constant 0 : i32
    return %c0_i32, %c0_i32_0 : i32, i32
  }
  func.func @transform_4(%arg0: i32) -> (i32, i32) {
    %c0_i32 = arith.constant 0 : i32
    %c0_i32_0 = arith.constant 0 : i32
    %c0_i32_1 = arith.constant 0 : i32
    return %c0_i32, %c0_i32_0 : i32, i32
  }
  func.func @transform_5(%arg0: i32) -> (i32, i32, i32) {
    %c0_i32 = arith.constant 0 : i32
    %c0_i32_0 = arith.constant 0 : i32
    %c0_i32_1 = arith.constant 0 : i32
    return %arg0, %c0_i32, %c0_i32_0 : i32, i32, i32
  }
}

</mosaic_0001>

<llo_original>
// kernel: tpu_custom_call.1
$region0: #{tpu_custom_call.1}
  #allocation0 [shape = 'u32[]', space=smem, size = 0x4, offset = 0x4, fixed_abs, tag = 'smem constant byte address 0x4 - core index']
  #allocation1 [shape = 'u32[72,128]{1,0:T(1,128)}', space=vmem, size = 0x9000, scoped, tag = 'internal scratch']
  %s0 = inlined_call_operand.hbm [shape: f32[8,16,128], index: 0, kind: input, shape index: {}]
  %s1 = inlined_call_operand.hbm [shape: f32[3,3,128], index: 1, kind: input, shape index: {}]
  %s2 = inlined_call_operand.vmem [shape: f32[1,128], index: 2, kind: input, shape index: {}]
  %s3 = inlined_call_operand.hbm [shape: f32[15,128], index: 3, kind: input, shape index: {}]
  %s4 = inlined_call_operand.vmem [shape: f32[1,128], index: 4, kind: input, shape index: {}]
  %s5 = inlined_call_operand.hbm [shape: f32[8,16,128], index: 5, kind: output, shape index: {}]
  %s6 = sld [smem:[#allocation0]]
  $region65: #{tpu_custom_call.1} parent=0
    _
  %s8 = ssub.s32 1, %s6
  %s9 = scalar_select 0, %s8, %s6
  $region1: #{tpu_custom_call.1} parent=0
    #allocation2 [shape = 'u8[16384]{0}', space=vmem, size = 0x4000, scoped, tag = 'input window, operand 0']
    #allocation3 [shape = 's32[2]{0}', space=sflag, size = 0x8, scoped, tag = 'scoped memory for tpu_custom_call.1']
    #allocation4 [shape = 's32[2]{0}', space=sflag, size = 0x8, scoped, tag = 'scoped memory for tpu_custom_call.1']
    #allocation5 [shape = 'u8[6144]{0}', space=vmem, size = 0x1800, scoped, tag = 'input window, operand 1, single buffered']
    #allocation6 [shape = 's32[1]{0}', space=sflag, size = 0x4, scoped, tag = 'scoped memory for tpu_custom_call.1']
    #allocation7 [shape = 'u8[8192]{0}', space=vmem, size = 0x2000, scoped, tag = 'input window, operand 3, single buffered']
    #allocation8 [shape = 'u8[16384]{0}', space=vmem, size = 0x4000, scoped, tag = 'output window, operand 0']
    %10 = vsyncpa [#allocation3], 0
    %s11 = scalar_lea.sflag [#allocation3], 1
    %12 = vsyncpa %s11, 0
    %13 = vsyncpa [#allocation6], 0
    %14 = vsyncpa [#allocation4], 0
    %s15 = scalar_lea.sflag [#allocation4], 1
    %16 = vsyncpa %s15, 0
    loop: start=0, step=1, limit=10
    $region2: #{tpu_custom_call.1} parent=1 // loop_pre_header
      _
    $region3: #{tpu_custom_call.1} parent=1 // loop_header
      %s18 = sphi 0, %s22
      %p19 = scmp.ge.s32.totalorder %s18, 10
      %s28 = sphi 0, %s30
      %s31 = sphi 0, %s28
      %s32 = sphi 0, %s31
      %s48 = sphi 0, %s32
      %s52 = sphi 0, %s52
      %s54 = sphi 0, %s52
      %s55 = sphi 0, %s54
      %s69 = sphi 0, %s55
      %s73 = sphi 0, %s73
      %s75 = sphi 0, %s73
      %s76 = sphi 0, %s75
      %s90 = sphi 0, %s76
      %s94 = sphi 0, %s94
      %s96 = sphi 0, %s94
      %s97 = sphi 0, %s96
      %s111 = sphi 0, %s97
      %s115 = sphi 0, %s115
      %s117 = sphi 0, %s115
      %s118 = sphi 0, %s117
      %s132 = sphi 0, %s118
      %s138 = sphi 0, %s140
      %s141 = sphi 0, %s138
      %s142 = sphi 0, %s141
      %s158 = sphi 0, %s142
    $region4: #{tpu_custom_call.1} parent=1 // loop_header_branch
      %21 = sbr.rel (%p19) target = $region8
    $region5: #{tpu_custom_call.1} parent=1 // loop_body
      %s23 = ssub.s32 %s18, 1
      %s24 = ssub.s32 %s18, 2
      %s25 = sadd.s32 %s18, 1
      %s26 = ssub.s32 %s18, %s25
      %p27 = scmp.eq.s32.totalorder %s26, 0
      %s29 = sadd.s32 %s28, 1
      %s30 = scalar_select %p27, %s28, %s29
      %p33 = pneg %p27
      %p34 = scmp.eq.s32.totalorder %s18, 7
      %p35 = por %p33, %p34
      %p36 = scmp.ne.s32.totalorder %s28, %s31
      %p37 = scmp.eq.s32.totalorder %s18, 0
      %p38 = por %p36, %p37
      %p39 = scmp.ne.s32.totalorder %s28, %s31
      %p40 = scmp.eq.s32.totalorder %s23, 7
      %p41 = por %p39, %p40
      %p42 = scmp.ne.s32.totalorder %s31, %s32
      %p43 = scmp.eq.s32.totalorder %s23, 0
      %p44 = por %p42, %p43
      %p45 = scmp.ne.s32.totalorder %s31, %s32
      %p46 = scmp.eq.s32.totalorder %s24, 7
      %p47 = por %p45, %p46
      %p49 = scmp.ne.s32.totalorder %s32, %s48
      %p50 = scmp.eq.s32.totalorder %s24, 0
      %p51 = por %p49, %p50
      %s53 = sadd.s32 %s52, 1
      %p56 = scmp.eq.s32.totalorder %s18, 7
      %p57 = scmp.ne.s32.totalorder %s52, %s54
      %p58 = scmp.eq.s32.totalorder %s18, 0
      %p59 = por %p57, %p58
      %p60 = scmp.ne.s32.totalorder %s52, %s54
      %p61 = scmp.eq.s32.totalorder %s23, 7
      %p62 = por %p60, %p61
      %p63 = scmp.ne.s32.totalorder %s54, %s55
      %p64 = scmp.eq.s32.totalorder %s23, 0
      %p65 = por %p63, %p64
      %p66 = scmp.ne.s32.totalorder %s54, %s55
      %p67 = scmp.eq.s32.totalorder %s24, 7
      %p68 = por %p66, %p67
      %p70 = scmp.ne.s32.totalorder %s55, %s69
      %p71 = scmp.eq.s32.totalorder %s24, 0
      %p72 = por %p70, %p71
      %s74 = sadd.s32 %s73, 1
      %p77 = scmp.eq.s32.totalorder %s18, 7
      %p78 = scmp.ne.s32.totalorder %s73, %s75
      %p79 = scmp.eq.s32.totalorder %s18, 0
      %p80 = por %p78, %p79
      %p81 = scmp.ne.s32.totalorder %s73, %s75
      %p82 = scmp.eq.s32.totalorder %s23, 7
      %p83 = por %p81, %p82
      %p84 = scmp.ne.s32.totalorder %s75, %s76
      %p85 = scmp.eq.s32.totalorder %s23, 0
      %p86 = por %p84, %p85
      %p87 = scmp.ne.s32.totalorder %s75, %s76
      %p88 = scmp.eq.s32.totalorder %s24, 7
      %p89 = por %p87, %p88
      %p91 = scmp.ne.s32.totalorder %s76, %s90
      %p92 = scmp.eq.s32.totalorder %s24, 0
      %p93 = por %p91, %p92
      %s95 = sadd.s32 %s94, 1
      %p98 = scmp.eq.s32.totalorder %s18, 7
      %p99 = scmp.ne.s32.totalorder %s94, %s96
      %p100 = scmp.eq.s32.totalorder %s18, 0
      %p101 = por %p99, %p100
      %p102 = scmp.ne.s32.totalorder %s94, %s96
      %p103 = scmp.eq.s32.totalorder %s23, 7
      %p104 = por %p102, %p103
      %p105 = scmp.ne.s32.totalorder %s96, %s97
      %p106 = scmp.eq.s32.totalorder %s23, 0
      %p107 = por %p105, %p106
      %p108 = scmp.ne.s32.totalorder %s96, %s97
      %p109 = scmp.eq.s32.totalorder %s24, 7
      %p110 = por %p108, %p109
      %p112 = scmp.ne.s32.totalorder %s97, %s111
      %p113 = scmp.eq.s32.totalorder %s24, 0
      %p114 = por %p112, %p113
      %s116 = sadd.s32 %s115, 1
      %p119 = scmp.eq.s32.totalorder %s18, 7
      %p120 = scmp.ne.s32.totalorder %s115, %s117
      %p121 = scmp.eq.s32.totalorder %s18, 0
      %p122 = por %p120, %p121
      %p123 = scmp.ne.s32.totalorder %s115, %s117
      %p124 = scmp.eq.s32.totalorder %s23, 7
      %p125 = por %p123, %p124
      %p126 = scmp.ne.s32.totalorder %s117, %s118
      %p127 = scmp.eq.s32.totalorder %s23, 0
      %p128 = por %p126, %p127
      %p129 = scmp.ne.s32.totalorder %s117, %s118
      %p130 = scmp.eq.s32.totalorder %s24, 7
      %p131 = por %p129, %p130
      %p133 = scmp.ne.s32.totalorder %s118, %s132
      %p134 = scmp.eq.s32.totalorder %s24, 0
      %p135 = por %p133, %p134
      %s136 = ssub.s32 %s18, %s25
      %p137 = scmp.eq.s32.totalorder %s136, 0
      %s139 = sadd.s32 %s138, 1
      %s140 = scalar_select %p137, %s138, %s139
      %p143 = pneg %p137
      %p144 = scmp.eq.s32.totalorder %s18, 7
      %p145 = por %p143, %p144
      %p146 = scmp.ne.s32.totalorder %s138, %s141
      %p147 = scmp.eq.s32.totalorder %s18, 0
      %p148 = por %p146, %p147
      %p149 = scmp.ne.s32.totalorder %s138, %s141
      %p150 = scmp.eq.s32.totalorder %s23, 7
      %p151 = por %p149, %p150
      %p152 = scmp.ne.s32.totalorder %s141, %s142
      %p153 = scmp.eq.s32.totalorder %s23, 0
      %p154 = por %p152, %p153
      %p155 = scmp.ne.s32.totalorder %s141, %s142
      %p156 = scmp.eq.s32.totalorder %s24, 7
      %p157 = por %p155, %p156
      %p159 = scmp.ne.s32.totalorder %s142, %s158
      %p160 = scmp.eq.s32.totalorder %s24, 0
      %p161 = por %p159, %p160
      %p162 = scmp.le.s32.totalorder 1, %s18
      %p163 = scmp.lt.s32.totalorder %s18, 9
      %p164 = pnand %p162, %p163
      %p165 = pneg %p164
      // Predicated region
      $region9: #{tpu_custom_call.1} parent=5 // pred_check
        _
      $region10: #{tpu_custom_call.1} parent=5 // pred_check_branch
        %167 = sbr.rel (%p164) target = $region12
      $region11: #{tpu_custom_call.1} parent=5 // pred_region
        %s168 = ssub.s32 %s18, 1
        // Predicated region
        $region13: #{tpu_custom_call.1} parent=11 // pred_check
          %p169 = pneg %p65
        $region14: #{tpu_custom_call.1} parent=11 // pred_check_branch
          %171 = sbr.rel (%p169) target = $region16
        $region15: #{tpu_custom_call.1} parent=11 // pred_region
          %173 = vsyncadd [#allocation6], 0
          %s174 = sshll.u32 %s1, 4
          %s175 = int_to_ptr.hbm [resolvable:$true] %s174
          %s176 = sshll.u32 [#allocation5], 4
          %s177 = int_to_ptr.vmem [resolvable:$true] %s176
          %182 = dma.hbm_to_vmem [thread:$0]  %s175, 192, %s177, [#allocation6], 64, 64, 4
        $region16: #{tpu_custom_call.1} parent=11 // pred_fallthru
          _
        // Predicated region
        $region17: #{tpu_custom_call.1} parent=11 // pred_check
          %p183 = pneg %p86
        $region18: #{tpu_custom_call.1} parent=11 // pred_check_branch
          %185 = sbr.rel (%p183) target = $region20
        $region19: #{tpu_custom_call.1} parent=11 // pred_region
          _
        $region20: #{tpu_custom_call.1} parent=11 // pred_fallthru
          _
        // Predicated region
        $region21: #{tpu_custom_call.1} parent=11 // pred_check
          %p186 = pneg %p107
        $region22: #{tpu_custom_call.1} parent=11 // pred_check_branch
          %188 = sbr.rel (%p186) target = $region24
        $region23: #{tpu_custom_call.1} parent=11 // pred_region
          %190 = vsyncadd [#allocation6], 0
          %s191 = sshll.u32 %s3, 4
          %s192 = int_to_ptr.hbm [resolvable:$true] %s191
          %s193 = sshll.u32 [#allocation7], 4
          %s194 = int_to_ptr.vmem [resolvable:$true] %s193
          %199 = dma.hbm_to_vmem [thread:$0]  %s192, 256, %s194, [#allocation6], 128, 128, 8
        $region24: #{tpu_custom_call.1} parent=11 // pred_fallthru
          _
        // Predicated region
        $region25: #{tpu_custom_call.1} parent=11 // pred_check
          %p200 = pneg %p128
        $region26: #{tpu_custom_call.1} parent=11 // pred_check_branch
          %202 = sbr.rel (%p200) target = $region28
        $region27: #{tpu_custom_call.1} parent=11 // pred_region
          _
        $region28: #{tpu_custom_call.1} parent=11 // pred_fallthru
          _
      $region12: #{tpu_custom_call.1} parent=5 // pred_fallthru
        _
      %p203 = scmp.lt.s32.totalorder %s18, 8
      // Predicated region
      $region29: #{tpu_custom_call.1} parent=5 // pred_check
        %p204 = pneg %p203
      $region30: #{tpu_custom_call.1} parent=5 // pred_check_branch
        %206 = sbr.rel (%p204) target = $region32
      $region31: #{tpu_custom_call.1} parent=5 // pred_region
        // Predicated region
        $region33: #{tpu_custom_call.1} parent=31 // pred_check
          %p207 = pneg %p38
        $region34: #{tpu_custom_call.1} parent=31 // pred_check_branch
          %209 = sbr.rel (%p207) target = $region36
        $region35: #{tpu_custom_call.1} parent=31 // pred_region
          %s210 = sand.u32 %s28, 1
          %s211 = scalar_lea.sflag [#allocation3], %s210
          %s212 = sand.u32 %s28, 1
          %s213 = smul.addr %s212, 16
          %s214 = scalar_lea.vmem [#allocation2], %s213
          %216 = vsyncadd %s211, 0
          %s217 = smul.addr %s18, 2
          %s218 = smul.addr %s217, 8
          %s219 = scalar_lea.hbm %s0, %s218
          %s220 = sshll.u32 %s219, 4
          %s221 = int_to_ptr.hbm [resolvable:$true] %s220
          %s222 = sshll.u32 %s214, 4
          %s223 = int_to_ptr.vmem [resolvable:$true] %s222
          %228 = dma.hbm_to_vmem [thread:$0]  %s221, 256, %s223, %s211, 128, 128, 8
        $region36: #{tpu_custom_call.1} parent=31 // pred_fallthru
          _
      $region32: #{tpu_custom_call.1} parent=5 // pred_fallthru
        _
      %p229 = scmp.le.s32.totalorder 1, %s18
      %p230 = scmp.lt.s32.totalorder %s18, 9
      %p231 = pnand %p229, %p230
      %p232 = pneg %p231
      // Predicated region
      $region37: #{tpu_custom_call.1} parent=5 // pred_check
        _
      $region38: #{tpu_custom_call.1} parent=5 // pred_check_branch
        %234 = sbr.rel (%p231) target = $region40
      $region39: #{tpu_custom_call.1} parent=5 // pred_region
        %s235 = ssub.s32 %s18, 1
        %s236 = sand.u32 %s31, 1
        %s237 = scalar_lea.sflag [#allocation3], %s236
        %s238 = sand.u32 %s31, 1
        %s239 = smul.addr %s238, 16
        %s240 = scalar_lea.vmem [#allocation2], %s239
        // Predicated region
        $region41: #{tpu_custom_call.1} parent=39 // pred_check
          %p241 = pneg %p44
        $region42: #{tpu_custom_call.1} parent=39 // pred_check_branch
          %243 = sbr.rel (%p241) target = $region44
        $region43: #{tpu_custom_call.1} parent=39 // pred_region
          %245 = dma.done %s237, 256
        $region44: #{tpu_custom_call.1} parent=39 // pred_fallthru
          _
        // Predicated region
        $region45: #{tpu_custom_call.1} parent=39 // pred_check
          %p246 = pneg %p65
        $region46: #{tpu_custom_call.1} parent=39 // pred_check_branch
          %248 = sbr.rel (%p246) target = $region48
        $region47: #{tpu_custom_call.1} parent=39 // pred_region
          %250 = dma.done [#allocation6], 192
        $region48: #{tpu_custom_call.1} parent=39 // pred_fallthru
          _
        // Predicated region
        $region49: #{tpu_custom_call.1} parent=39 // pred_check
          %p251 = pneg %p107
        $region50: #{tpu_custom_call.1} parent=39 // pred_check_branch
          %253 = sbr.rel (%p251) target = $region52
        $region51: #{tpu_custom_call.1} parent=39 // pred_region
          %255 = dma.done [#allocation6], 256
        $region52: #{tpu_custom_call.1} parent=39 // pred_fallthru
          _
        %s256 = sand.u32 %s31, 1
        %s257 = scalar_lea.sflag [#allocation3], %s256
        %s258 = sand.u32 %s31, 1
        %s259 = smul.addr %s258, 16
        %s260 = scalar_lea.vmem [#allocation2], %s259
        %p261 = pneg %p44
        %p262 = pneg %p41
        %p263 = pneg %p65
        %p264 = pneg %p62
        %p265 = pneg %p86
        %p266 = pneg %p83
        %p267 = pneg %p107
        %p268 = pneg %p104
        %p269 = pneg %p128
        %p270 = pneg %p125
        %p271 = pneg %p154
        %p272 = pneg %p151
        %s273 = sand.u32 %s141, 1
        %s274 = scalar_lea.sflag [#allocation4], %s273
        %s275 = sand.u32 %s141, 1
        %s276 = smul.addr %s275, 16
        %s277 = scalar_lea.vmem [#allocation8], %s276
        %v278 = vld [vmem:[%s240] sm:$0xff]
        %v279 = vld [vmem:[%s240 + $0x8] sm:$0xff]
        %v280 = vlaneseq
        %v281 = vshrl.u32 %v280, 7
        %v282 = vadd.s32 %v281, 8
        %v283 = vrot.slane %v278, 7
        %v284 = vrot.slane %v279, 7
        %vm285 = vcmp.lt.s32.totalorder %v281, 1
        %v286 = vsel %vm285, %v283, %v284
        %v287 = vsel %vm285, %v284, %v283
        %vm288 = vcmp.ge.s32.totalorder %v281, 1
        %vm289 = vcmp.ge.s32.totalorder %v282, 1
        %v290 = vsel %vm288, %v287, 0.0
        %v291 = vsel %vm289, %v286, 0.0
        %292 = vrot.lane.b32.xlu0 %v290, 8
        %v293 = vpop.permute.xlu0 %292
        %294 = vrot.lane.b32.xlu0 %v291, 8
        %v295 = vpop.permute.xlu0 %294
        %v296 = vld [vmem:[#allocation5] sm:$0x1]
        %v297 = vperm.slane %v296, 0
        %v298 = vmul.f32 %v293, %v297
        %v299 = vmul.f32 %v295, %v297
        %v300 = vadd.f32 %v298, 0.0
        %v301 = vadd.f32 %v299, 0.0
        %v302 = vld [vmem:[#allocation5 + $0x1] sm:$0x1]
        %v303 = vperm.slane %v302, 0
        %v304 = vmul.f32 %v290, %v303
        %v305 = vmul.f32 %v291, %v303
        %v306 = vadd.f32 %v300, %v304
        %v307 = vadd.f32 %v301, %v305
        %308 = vrot.lane.b32.xlu0 %v290, 120
        %v309 = vpop.permute.xlu0 %308
        %310 = vrot.lane.b32.xlu0 %v291, 120
        %v311 = vpop.permute.xlu0 %310
        %v312 = vld [vmem:[#allocation5 + $0x2] sm:$0x1]
        %v313 = vperm.slane %v312, 0
        %v314 = vmul.f32 %v309, %v313
        %v315 = vmul.f32 %v311, %v313
        %v316 = vadd.f32 %v306, %v314
        %v317 = vadd.f32 %v307, %v315
        %318 = vrot.lane.b32.xlu0 %v278, 8
        %v319 = vpop.permute.xlu0 %318
        %320 = vrot.lane.b32.xlu0 %v279, 8
        %v321 = vpop.permute.xlu0 %320
        %s322 = scalar_lea.vmem [#allocation5], 4
        %v323 = vld [vmem:[%s322] sm:$0x1]
        %v324 = vperm.slane %v323, 0
        %v325 = vmul.f32 %v319, %v324
        %v326 = vmul.f32 %v321, %v324
        %v327 = vadd.f32 %v316, %v325
        %v328 = vadd.f32 %v317, %v326
        %v329 = vld [vmem:[%s322 + $0x1] sm:$0x1]
        %v330 = vperm.slane %v329, 0
        %v331 = vmul.f32 %v278, %v330
        %v332 = vmul.f32 %v279, %v330
        %v333 = vadd.f32 %v327, %v331
        %v334 = vadd.f32 %v328, %v332
        %335 = vrot.lane.b32.xlu0 %v278, 120
        %v336 = vpop.permute.xlu0 %335
        %337 = vrot.lane.b32.xlu0 %v279, 120
        %v338 = vpop.permute.xlu0 %337
        %v339 = vld [vmem:[%s322 + $0x2] sm:$0x1]
        %v340 = vperm.slane %v339, 0
        %v341 = vmul.f32 %v336, %v340
        %v342 = vmul.f32 %v338, %v340
        %v343 = vadd.f32 %v333, %v341
        %v344 = vadd.f32 %v334, %v342
        %v345 = vrot.slane %v278, 1
        %v346 = vrot.slane %v279, 1
        %vm347 = vcmp.lt.s32.totalorder %v281, 7
        %v348 = vsel %vm347, %v345, %v346
        %v349 = vsel %vm347, %v346, %v345
        %vm350 = vcmp.lt.s32.totalorder %v281, 15
        %vm351 = vcmp.lt.s32.totalorder %v282, 15
        %v352 = vsel %vm350, %v348, 0.0
        %v353 = vsel %vm351, %v349, 0.0
        %354 = vrot.lane.b32.xlu0 %v352, 8
        %v355 = vpop.permute.xlu0 %354
        %356 = vrot.lane.b32.xlu0 %v353, 8
        %v357 = vpop.permute.xlu0 %356
        %s358 = scalar_lea.vmem [#allocation5], 8
        %v359 = vld [vmem:[%s358] sm:$0x1]
        %v360 = vperm.slane %v359, 0
        %v361 = vmul.f32 %v355, %v360
        %v362 = vmul.f32 %v357, %v360
        %v363 = vadd.f32 %v343, %v361
        %v364 = vadd.f32 %v344, %v362
        %v365 = vld [vmem:[%s358 + $0x1] sm:$0x1]
        %v366 = vperm.slane %v365, 0
        %v367 = vmul.f32 %v352, %v366
        %v368 = vmul.f32 %v353, %v366
        %v369 = vadd.f32 %v363, %v367
        %v370 = vadd.f32 %v364, %v368
        %371 = vrot.lane.b32.xlu0 %v352, 120
        %v372 = vpop.permute.xlu0 %371
        %373 = vrot.lane.b32.xlu0 %v353, 120
        %v374 = vpop.permute.xlu0 %373
        %v375 = vld [vmem:[%s358 + $0x2] sm:$0x1]
        %v376 = vperm.slane %v375, 0
        %v377 = vmul.f32 %v372, %v376
        %v378 = vmul.f32 %v374, %v376
        %v379 = vadd.f32 %v369, %v377
        %v380 = vadd.f32 %v370, %v378
        %v381 = vld [vmem:[%s2] sm:$0x1]
        %v383 = vperm.slane %v381, 0
        %v385 = vadd.f32 %v379, %v383
        %v386 = vadd.f32 %v380, %v383
        %v387 = vadd.f32 %v385, 3.0
        %v388 = vadd.f32 %v386, 3.0
        %v389 = vmax.f32 %v387, 0.0
        %v390 = vmax.f32 %v388, 0.0
        %v391 = vmin.f32 %v389, 6.0
        %v392 = vmin.f32 %v390, 6.0
        %v393 = vmul.f32 %v385, %v391
        %v394 = vmul.f32 %v386, %v392
        %v395 = vmul.f32 %v393, 0.16666667
        %v396 = vmul.f32 %v394, 0.16666667
        %397 = vrot.lane.b32.xlu0 %v395, 121
        %v398 = vpop.permute.xlu0 %397
        %399 = vrot.lane.b32.xlu0 %v396, 121
        %v400 = vpop.permute.xlu0 %399
        %v401 = vld [vmem:[#allocation7] sm:$0x1]
        %v402 = vperm.slane %v401, 0
        %v403 = vmul.f32 %v398, %v402
        %v404 = vmul.f32 %v400, %v402
        %v405 = vadd.f32 %v403, 0.0
        %v406 = vadd.f32 %v404, 0.0
        %407 = vrot.lane.b32.xlu0 %v395, 122
        %v408 = vpop.permute.xlu0 %407
        %409 = vrot.lane.b32.xlu0 %v396, 122
        %v410 = vpop.permute.xlu0 %409
        %v411 = vld [vmem:[#allocation7 + $0x1] sm:$0x1]
        %v412 = vperm.slane %v411, 0
        %v413 = vmul.f32 %v408, %v412
        %v414 = vmul.f32 %v410, %v412
        %v415 = vadd.f32 %v405, %v413
        %v416 = vadd.f32 %v406, %v414
        %417 = vrot.lane.b32.xlu0 %v395, 123
        %v418 = vpop.permute.xlu0 %417
        %419 = vrot.lane.b32.xlu0 %v396, 123
        %v420 = vpop.permute.xlu0 %419
        %v421 = vld [vmem:[#allocation7 + $0x2] sm:$0x1]
        %v422 = vperm.slane %v421, 0
        %v423 = vmul.f32 %v418, %v422
        %v424 = vmul.f32 %v420, %v422
        %v425 = vadd.f32 %v415, %v423
        %v426 = vadd.f32 %v416, %v424
        %427 = vrot.lane.b32.xlu0 %v395, 124
        %v428 = vpop.permute.xlu0 %427
        %429 = vrot.lane.b32.xlu0 %v396, 124
        %v430 = vpop.permute.xlu0 %429
        %v431 = vld [vmem:[#allocation7 + $0x3] sm:$0x1]
        %v432 = vperm.slane %v431, 0
        %v433 = vmul.f32 %v428, %v432
        %v434 = vmul.f32 %v430, %v432
        %v435 = vadd.f32 %v425, %v433
        %v436 = vadd.f32 %v426, %v434
        %437 = vrot.lane.b32.xlu0 %v395, 125
        %v438 = vpop.permute.xlu0 %437
        %439 = vrot.lane.b32.xlu0 %v396, 125
        %v440 = vpop.permute.xlu0 %439
        %v441 = vld [vmem:[#allocation7 + $0x4] sm:$0x1]
        %v442 = vperm.slane %v441, 0
        %v443 = vmul.f32 %v438, %v442
        %v444 = vmul.f32 %v440, %v442
        %v445 = vadd.f32 %v435, %v443
        %v446 = vadd.f32 %v436, %v444
        %447 = vrot.lane.b32.xlu0 %v395, 126
        %v448 = vpop.permute.xlu0 %447
        %449 = vrot.lane.b32.xlu0 %v396, 126
        %v450 = vpop.permute.xlu0 %449
        %v451 = vld [vmem:[#allocation7 + $0x5] sm:$0x1]
        %v452 = vperm.slane %v451, 0
        %v453 = vmul.f32 %v448, %v452
        %v454 = vmul.f32 %v450, %v452
        %v455 = vadd.f32 %v445, %v453
        %v456 = vadd.f32 %v446, %v454
        %457 = vrot.lane.b32.xlu0 %v395, 127
        %v458 = vpop.permute.xlu0 %457
        %459 = vrot.lane.b32.xlu0 %v396, 127
        %v460 = vpop.permute.xlu0 %459
        %v461 = vld [vmem:[#allocation7 + $0x6] sm:$0x1]
        %v462 = vperm.slane %v461, 0
        %v463 = vmul.f32 %v458, %v462
        %v464 = vmul.f32 %v460, %v462
        %v465 = vadd.f32 %v455, %v463
        %v466 = vadd.f32 %v456, %v464
        %v467 = vld [vmem:[#allocation7 + $0x7] sm:$0x1]
        %v468 = vperm.slane %v467, 0
        %v469 = vmul.f32 %v395, %v468
        %v470 = vmul.f32 %v396, %v468
        %v471 = vadd.f32 %v465, %v469
        %v472 = vadd.f32 %v466, %v470
        %473 = vrot.lane.b32.xlu0 %v395, 1
        %v474 = vpop.permute.xlu0 %473
        %475 = vrot.lane.b32.xlu0 %v396, 1
        %v476 = vpop.permute.xlu0 %475
        %v477 = vld [vmem:[#allocation7 + $0x8] sm:$0x1]
        %v478 = vperm.slane %v477, 0
        %v479 = vmul.f32 %v474, %v478
        %v480 = vmul.f32 %v476, %v478
        %v481 = vadd.f32 %v471, %v479
        %v482 = vadd.f32 %v472, %v480
        %483 = vrot.lane.b32.xlu0 %v395, 2
        %v484 = vpop.permute.xlu0 %483
        %485 = vrot.lane.b32.xlu0 %v396, 2
        %v486 = vpop.permute.xlu0 %485
        %v487 = vld [vmem:[#allocation7 + $0x9] sm:$0x1]
        %v488 = vperm.slane %v487, 0
        %v489 = vmul.f32 %v484, %v488
        %v490 = vmul.f32 %v486, %v488
        %v491 = vadd.f32 %v481, %v489
        %v492 = vadd.f32 %v482, %v490
        %493 = vrot.lane.b32.xlu0 %v395, 3
        %v494 = vpop.permute.xlu0 %493
        %495 = vrot.lane.b32.xlu0 %v396, 3
        %v496 = vpop.permute.xlu0 %495
        %v497 = vld [vmem:[#allocation7 + $0xa] sm:$0x1]
        %v498 = vperm.slane %v497, 0
        %v499 = vmul.f32 %v494, %v498
        %v500 = vmul.f32 %v496, %v498
        %v501 = vadd.f32 %v491, %v499
        %v502 = vadd.f32 %v492, %v500
        %503 = vrot.lane.b32.xlu0 %v395, 4
        %v504 = vpop.permute.xlu0 %503
        %505 = vrot.lane.b32.xlu0 %v396, 4
        %v506 = vpop.permute.xlu0 %505
        %v507 = vld [vmem:[#allocation7 + $0xb] sm:$0x1]
        %v508 = vperm.slane %v507, 0
        %v509 = vmul.f32 %v504, %v508
        %v510 = vmul.f32 %v506, %v508
        %v511 = vadd.f32 %v501, %v509
        %v512 = vadd.f32 %v502, %v510
        %513 = vrot.lane.b32.xlu0 %v395, 5
        %v514 = vpop.permute.xlu0 %513
        %515 = vrot.lane.b32.xlu0 %v396, 5
        %v516 = vpop.permute.xlu0 %515
        %v517 = vld [vmem:[#allocation7 + $0xc] sm:$0x1]
        %v518 = vperm.slane %v517, 0
        %v519 = vmul.f32 %v514, %v518
        %v520 = vmul.f32 %v516, %v518
        %v521 = vadd.f32 %v511, %v519
        %v522 = vadd.f32 %v512, %v520
        %523 = vrot.lane.b32.xlu0 %v395, 6
        %v524 = vpop.permute.xlu0 %523
        %525 = vrot.lane.b32.xlu0 %v396, 6
        %v526 = vpop.permute.xlu0 %525
        %v527 = vld [vmem:[#allocation7 + $0xd] sm:$0x1]
        %v528 = vperm.slane %v527, 0
        %v529 = vmul.f32 %v524, %v528
        %v530 = vmul.f32 %v526, %v528
        %v531 = vadd.f32 %v521, %v529
        %v532 = vadd.f32 %v522, %v530
        %533 = vrot.lane.b32.xlu0 %v395, 7
        %v534 = vpop.permute.xlu0 %533
        %535 = vrot.lane.b32.xlu0 %v396, 7
        %v536 = vpop.permute.xlu0 %535
        %v537 = vld [vmem:[#allocation7 + $0xe] sm:$0x1]
        %v538 = vperm.slane %v537, 0
        %v539 = vmul.f32 %v534, %v538
        %v540 = vmul.f32 %v536, %v538
        %v541 = vadd.f32 %v531, %v539
        %v542 = vadd.f32 %v532, %v540
        %v543 = vld [vmem:[%s4] sm:$0x1]
        %v545 = vperm.slane %v543, 0
        %v547 = vadd.f32 %v541, %v545
        %v548 = vadd.f32 %v542, %v545
        %v549 = vadd.f32 %v547, 3.0
        %v550 = vadd.f32 %v548, 3.0
        %v551 = vmax.f32 %v549, 0.0
        %v552 = vmax.f32 %v550, 0.0
        %v553 = vmin.f32 %v551, 6.0
        %v554 = vmin.f32 %v552, 6.0
        %v555 = vmul.f32 %v547, %v553
        %v556 = vmul.f32 %v548, %v554
        %v557 = vmul.f32 %v555, 0.16666667
        %v558 = vmul.f32 %v556, 0.16666667
        %v559 = vadd.f32 %v557, %v278
        %v560 = vadd.f32 %v558, %v279
        %561 = vst [vmem:[%s277] sm:$0xff] %v559
        %562 = vst [vmem:[%s277 + $0x8] sm:$0xff] %v560
        %s563 = sand.u32 %s141, 1
        %s564 = scalar_lea.sflag [#allocation4], %s563
        %s565 = sand.u32 %s141, 1
        %s566 = smul.addr %s565, 16
        %s567 = scalar_lea.vmem [#allocation8], %s566
        // Predicated region
        $region53: #{tpu_custom_call.1} parent=39 // pred_check
          %p568 = pneg %p151
        $region54: #{tpu_custom_call.1} parent=39 // pred_check_branch
          %570 = sbr.rel (%p568) target = $region56
        $region55: #{tpu_custom_call.1} parent=39 // pred_region
          %572 = vsyncadd %s564, 0
          %s573 = smul.addr %s23, 2
          %s574 = smul.addr %s573, 8
          %s575 = scalar_lea.hbm %s5, %s574
          %s576 = sshll.u32 %s567, 4
          %s577 = int_to_ptr.vmem [resolvable:$true] %s576
          %s578 = sshll.u32 %s575, 4
          %s579 = int_to_ptr.hbm [resolvable:$true] %s578
          %584 = dma.vmem_to_hbm [thread:$0]  %s577, 256, %s579, %s564, 128, 128, 8
        $region56: #{tpu_custom_call.1} parent=39 // pred_fallthru
          _
      $region40: #{tpu_custom_call.1} parent=5 // pred_fallthru
        _
      %p585 = scmp.le.s32.totalorder 2, %s18
      // Predicated region
      $region57: #{tpu_custom_call.1} parent=5 // pred_check
        %p586 = pneg %p585
      $region58: #{tpu_custom_call.1} parent=5 // pred_check_branch
        %588 = sbr.rel (%p586) target = $region60
      $region59: #{tpu_custom_call.1} parent=5 // pred_region
        %s589 = ssub.s32 %s18, 2
        // Predicated region
        $region61: #{tpu_custom_call.1} parent=59 // pred_check
          %p590 = pneg %p157
        $region62: #{tpu_custom_call.1} parent=59 // pred_check_branch
          %592 = sbr.rel (%p590) target = $region64
        $region63: #{tpu_custom_call.1} parent=59 // pred_region
          %s593 = sand.u32 %s142, 1
          %s594 = scalar_lea.sflag [#allocation4], %s593
          %s595 = sand.u32 %s142, 1
          %s596 = smul.addr %s595, 16
          %s597 = scalar_lea.vmem [#allocation8], %s596
          %599 = dma.done %s594, 256
        $region64: #{tpu_custom_call.1} parent=59 // pred_fallthru
          _
      $region60: #{tpu_custom_call.1} parent=5 // pred_fallthru
        _
    $region6: #{tpu_custom_call.1} parent=1 // loop_footer
      %s22 = sadd.s32 1, %s18
    $region7: #{tpu_custom_call.1} parent=1 // loop_footer_branch
      %17 = sbr.rel target = $region3
    $region8: #{tpu_custom_call.1} parent=1 // loop_exit
      _
    %600 = vsyncpa [#allocation3], 1
    %s601 = scalar_lea.sflag [#allocation3], 1
    %602 = vsyncpa %s601, 1
    %603 = vsyncpa [#allocation6], 1
    %604 = vsyncpa [#allocation4], 1
    %s605 = scalar_lea.sflag [#allocation4], 1
    %606 = vsyncpa %s605, 1

</llo_original>
